<compile_context>
chip_gen: v7x
topology: tpu7x:2x2x1
jax: 0.10.0
libtpu: 0.0.40
codegen_flags: <defaults>
</compile_context>

<pallas_src>
import math

import jax
import jax.numpy as jnp
from jax.experimental import pallas as pl
from jax.experimental.pallas import tpu as pltpu


# ----------------------------- Pallas kernel --------------------------------

def _outp_kernel(x_ref, w1_ref, t_ref, b_ref, o_ref):
    """Fused OutpLayer forward for one (batch, H-tile) block.

    x_ref : (1, C, TH, W) VMEM   -- native NCHW tile (no host transpose)
    w1_ref: (C, 1, 1)     VMEM   -- conv1 weights (f32)
    t_ref : (W, WP)       VMEM   -- Toeplitz(conv2 weights), zero-padded lane-dense
    b_ref : (1,)          SMEM   -- folded bias  b1 * sum(w2) + b2
    o_ref : (1, TH, WP)   VMEM
    """
    # conv1: w1-weighted reduction over channels (VPU). Promotes to f32.
    y = jnp.sum(x_ref[0] * w1_ref[...], axis=0)                      # (TH, W) f32
    # conv2: single matmul against the Toeplitz matrix (MXU), f32 accumulate.
    z = jnp.dot(y, t_ref[...], preferred_element_type=jnp.float32)   # (TH, WP)
    o_ref[0] = (z + b_ref[0]).astype(o_ref.dtype)


# ------------------------------ host wrappers --------------------------------

def make_outp_params(w1, b1, w2, b2, width):
    """Build static kernel parameters ONCE (hoisted out of the per-call path).

    w1: (1, C, 1, 1)  conv1 weight      b1: (1,) conv1 bias
    w2: (1, 1, 1, E)  conv2 weight      b2: (1,) conv2 bias
    width: input spatial width W.
    """
    c = w1.shape[1]
    e = w2.shape[-1]
    wout = width - e + 1
    wp = 128 * pl.cdiv(wout, 128)                    # lane-dense padded output width

    w1_col = w1.reshape(c, 1, 1).astype(jnp.float32)           # (C, 1, 1)
    w2_vec = w2.reshape(e).astype(jnp.float32)                 # (E,)

    # Toeplitz T[w, w'] = w2[w - w'] for 0 <= w - w' < E, zero elsewhere and
    # zero in the padded columns w' >= Wout.
    idx = jnp.arange(width)[:, None] - jnp.arange(wp)[None, :]
    mask = (idx >= 0) & (idx < e) & (jnp.arange(wp)[None, :] < wout)
    t = jnp.where(mask, w2_vec[jnp.clip(idx, 0, e - 1)], 0.0).astype(jnp.float32)

    b_eff = (b1.astype(jnp.float32) * jnp.sum(w2_vec)
             + b2.astype(jnp.float32)).reshape(1)              # folded bias

    return w1_col, t, b_eff, wout


def _pick_h_tile(h, c, w, itemsize, budget_bytes=4 << 20):
    """H-tile: full H if it fits a ~4 MiB x-buffer, else the largest multiple
    of 8 under the budget (double-buffered this stays under v5e's 16 MiB
    scoped-VMEM default; ragged last tile handled via pl.cdiv)."""
    cap = max(8, ((budget_bytes // max(1, c * w * itemsize)) // 8) * 8)
    return h if h <= cap else cap


def outp_layer_apply(x_nchw, params):
    """Pallas implementation of OutpLayer.forward. x_nchw: (N, C=emb_size, H, W)."""
    w1_col, t, b_eff, wout = params
    n, c, h, w = x_nchw.shape
    wp = t.shape[1]
    th = _pick_h_tile(h, c, w, x_nchw.dtype.itemsize)
    grid = (n, pl.cdiv(h, th))

    out_itemsize = x_nchw.dtype.itemsize
    flops = 2 * n * h * w * (c + wp)
    bytes_accessed = (x_nchw.size * x_nchw.dtype.itemsize
                      + n * h * wp * out_itemsize
                      + t.size * 4 + w1_col.size * 4 + 4)

    z = pl.pallas_call(
        _outp_kernel,
        out_shape=jax.ShapeDtypeStruct((n, h, wp), x_nchw.dtype),
        grid=grid,
        in_specs=[
            pl.BlockSpec((1, c, th, w), lambda i, j: (i, 0, j, 0)),   # x: native NCHW tile
            pl.BlockSpec((c, 1, 1), lambda i, j: (0, 0, 0)),          # w1
            pl.BlockSpec((w, wp), lambda i, j: (0, 0)),               # Toeplitz
            pl.BlockSpec(memory_space=pltpu.MemorySpace.SMEM),        # folded bias
        ],
        out_specs=pl.BlockSpec((1, th, wp), lambda i, j: (i, j, 0)),
        compiler_params=pltpu.CompilerParams(
            dimension_semantics=("parallel", "parallel")),  # shards across v7x's 2 TCs
        cost_estimate=pl.CostEstimate(flops=flops, transcendentals=0,
                                      bytes_accessed=bytes_accessed),
    )(x_nchw, w1_col, t, b_eff)

    # PyTorch NCHW output layout: (N, 1, H, Wout); drop the lane-padding columns.
    return z[:, None, :, :wout]


def _reference(x_nchw, w1, b1, w2, b2):
    """Plain-JAX reference mirroring the PyTorch forward (for verification)."""
    y = jnp.einsum("nchw,oc->nohw", x_nchw, w1[:, :, 0, 0]) + b1[None, :, None, None]
    kvec = w2[0, 0, 0, :]
    e = kvec.shape[0]
    wout = x_nchw.shape[3] - e + 1
    z = jnp.stack(
        [(y[:, 0, :, s:s + e] * kvec).sum(-1) for s in range(wout)], axis=-1
    ) + b2[0]
    return z[:, None, :, :]


# ----------------------------------- main ------------------------------------

if __name__ == "__main__":
    N, EMB, H, W = 2, 32, 8, 40   # output width = W - EMB + 1 = 9

    key = jax.random.PRNGKey(0)
    k1, k2, kx = jax.random.split(key, 3)

    # xavier_uniform-style init (matching PyTorch fan computations), zero biases
    # as in OutpLayer._init_parameters.
    bound1 = math.sqrt(6.0 / (EMB * 1 * 1 + 1 * 1 * 1))     # Conv2d(EMB, 1, 1)
    w1 = jax.random.uniform(k1, (1, EMB, 1, 1), jnp.float32, -bound1, bound1)
    b1 = jnp.zeros((1,), jnp.float32)

    bound2 = math.sqrt(6.0 / (1 * 1 * EMB + 1 * 1 * EMB))   # Conv2d(1, 1, (1, EMB))
    w2 = jax.random.uniform(k2, (1, 1, 1, EMB), jnp.float32, -bound2, bound2)
    b2 = jnp.zeros((1,), jnp.float32)

    x = jax.random.normal(kx, (N, EMB, H, W), jnp.float32)

    # Static params built once (hoisted out of the per-call path).
    params = make_outp_params(w1, b1, w2, b2, W)

    # f32 path
    out = jax.block_until_ready(outp_layer_apply(x, params))
    ref = _reference(x, w1, b1, w2, b2)
    assert out.shape == (N, 1, H, W - EMB + 1), out.shape
    assert jnp.allclose(out, ref, atol=1e-4, rtol=1e-4), (
        float(jnp.max(jnp.abs(out - ref))))

    # bf16 activation path (halves HBM read traffic on the memory-bound x stream).
    x_bf = x.astype(jnp.bfloat16)
    out_bf = jax.block_until_ready(outp_layer_apply(x_bf, params))
    ref_bf = _reference(x_bf.astype(jnp.float32), w1, b1, w2, b2)
    assert jnp.allclose(out_bf.astype(jnp.float32), ref_bf, atol=2e-2, rtol=2e-2), (
        float(jnp.max(jnp.abs(out_bf.astype(jnp.float32) - ref_bf))))

    print("KERNEL_OK")
</pallas_src>

<mosaic_0001>
module attributes {stable_mosaic.version = 11 : i64} {
  func.func @_outp_kernel(%arg0: i32, %arg1: i32, %arg2: memref<1x32x8x40xf32, #tpu.memory_space<vmem>>, %arg3: memref<32x1x1xf32, #tpu.memory_space<vmem>>, %arg4: memref<40x128xf32, #tpu.memory_space<vmem>>, %arg5: memref<1xf32, #tpu.memory_space<smem>>, %arg6: memref<1x8x128xf32, #tpu.memory_space<vmem>>) attributes {dimension_semantics = [#tpu.dimension_semantics<parallel>, #tpu.dimension_semantics<parallel>], iteration_bounds = array<i64: 2, 1>, scalar_prefetch = 0 : i64, scratch_operands = 0 : i64, tpu.core_type = #tpu.core_type<tc>, window_params = [{transform_indices = @transform_0, window_bounds = array<i64: 1, 32, 8, 40>}, {pipeline_mode = #tpu.pipeline_mode<synchronous>, transform_indices = @transform_1, window_bounds = array<i64: 32, 1, 1>}, {pipeline_mode = #tpu.pipeline_mode<synchronous>, transform_indices = @transform_2, window_bounds = array<i64: 40, 128>}, {transform_indices = @transform_3, window_bounds = array<i64: 1>}, {transform_indices = @transform_4, window_bounds = array<i64: 1, 8, 128>}]} {
    %c0 = arith.constant 0 : index
    %c0_0 = arith.constant 0 : index
    %c0_1 = arith.constant 0 : index
    %c0_2 = arith.constant 0 : index
    %0 = vector.load %arg2[%c0, %c0_0, %c0_1, %c0_2] : memref<1x32x8x40xf32, #tpu.memory_space<vmem>>, vector<1x32x8x40xf32>
    %1 = vector.shape_cast %0 : vector<1x32x8x40xf32> to vector<32x8x40xf32>
    %c0_3 = arith.constant 0 : index
    %c0_4 = arith.constant 0 : index
    %c0_5 = arith.constant 0 : index
    %2 = vector.load %arg3[%c0_3, %c0_4, %c0_5] : memref<32x1x1xf32, #tpu.memory_space<vmem>>, vector<32x1x1xf32>
    %3 = vector.broadcast %2 : vector<32x1x1xf32> to vector<32x8x40xf32>
    %4 = arith.mulf %1, %3 : vector<32x8x40xf32>
    %cst = arith.constant dense<0.000000e+00> : vector<8x40xf32>
    %5 = vector.multi_reduction <add>, %4, %cst [0] : vector<32x8x40xf32> to vector<8x40xf32>
    %c0_6 = arith.constant 0 : index
    %c0_7 = arith.constant 0 : index
    %6 = vector.load %arg4[%c0_6, %c0_7] : memref<40x128xf32, #tpu.memory_space<vmem>>, vector<40x128xf32>
    %cst_8 = arith.constant dense<0.000000e+00> : vector<8x128xf32>
    %7 = tpu.matmul %5, %6, %cst_8 {dimension_numbers = #tpu.dot_dimension_numbers<[1], [0], [0], [1], [0, 0, 1, 1], [], []>} : vector<8x40xf32>, vector<40x128xf32>, vector<8x128xf32> -> vector<8x128xf32>
    %c0_9 = arith.constant 0 : index
    %8 = memref.load %arg5[%c0_9] : memref<1xf32, #tpu.memory_space<smem>>
    %9 = vector.broadcast %8 : f32 to vector<8x128xf32>
    %10 = arith.addf %7, %9 : vector<8x128xf32>
    %c0_10 = arith.constant 0 : index
    %c0_11 = arith.constant 0 : index
    %c0_12 = arith.constant 0 : index
    %11 = vector.load %arg6[%c0_10, %c0_11, %c0_12] : memref<1x8x128xf32, #tpu.memory_space<vmem>>, vector<1x8x128xf32>
    %12 = vector.shape_cast %11 : vector<1x8x128xf32> to vector<8x128xf32>
    %13 = vector.shape_cast %10 : vector<8x128xf32> to vector<1x8x128xf32>
    tpu.vector_store %arg6[%c0_10, %c0_11, %c0_12], %13 {strides = array<i32>} : memref<1x8x128xf32, #tpu.memory_space<vmem>>, vector<1x8x128xf32>,
    return
  }
  func.func @transform_0(%arg0: i32, %arg1: i32) -> (i32, i32, i32, i32) {
    %c0_i32 = arith.constant 0 : i32
    %c0_i32_0 = arith.constant 0 : i32
    %c0_i32_1 = arith.constant 0 : i32
    return %arg0, %c0_i32, %arg1, %c0_i32_0 : i32, i32, i32, i32
  }
  func.func @transform_1(%arg0: i32, %arg1: i32) -> (i32, i32, i32) {
    %c0_i32 = arith.constant 0 : i32
    %c0_i32_0 = arith.constant 0 : i32
    %c0_i32_1 = arith.constant 0 : i32
    %c0_i32_2 = arith.constant 0 : i32
    return %c0_i32, %c0_i32_0, %c0_i32_1 : i32, i32, i32
  }
  func.func @transform_2(%arg0: i32, %arg1: i32) -> (i32, i32) {
    %c0_i32 = arith.constant 0 : i32
    %c0_i32_0 = arith.constant 0 : i32
    %c0_i32_1 = arith.constant 0 : i32
    return %c0_i32, %c0_i32_0 : i32, i32
  }
  func.func @transform_3(%arg0: i32, %arg1: i32) -> i32 {
    %c0_i32 = arith.constant 0 : i32
    %c0_i32_0 = arith.constant 0 : i32
    return %c0_i32 : i32
  }
  func.func @transform_4(%arg0: i32, %arg1: i32) -> (i32, i32, i32) {
    %c0_i32 = arith.constant 0 : i32
    %c0_i32_0 = arith.constant 0 : i32
    return %arg0, %arg1, %c0_i32 : i32, i32, i32
  }
}

</mosaic_0001>

<llo_original>
// kernel: tpu_custom_call.1
$region0: #{tpu_custom_call.1}
  #allocation0 [shape = 'u32[]', space=smem, size = 0x4, offset = 0x4, fixed_abs, tag = 'smem constant byte address 0x4 - core index']
  #allocation1 [shape = 'u32[144,128]{1,0:T(1,128)}', space=vmem, size = 0x12000, scoped, tag = 'internal scratch']
  #allocation2 [shape = 'f32[1]{0:T(128)S(6)}', space=smem, size = 0x200, scoped, tag = 'scoped memory for tpu_custom_call.1']
  %s0 = inlined_call_operand.hbm [shape: f32[2,32,8,40], index: 0, kind: input, shape index: {}]
  %s1 = inlined_call_operand.vmem [shape: f32[32,1,1], index: 1, kind: input, shape index: {}]
  %s2 = inlined_call_operand.vmem [shape: f32[40,128], index: 2, kind: input, shape index: {}]
  %s3 = inlined_call_operand.<no memory space> [shape: f32[1], index: 3, kind: input, shape index: {}]
  %s4 = inlined_call_operand.hbm [shape: f32[2,8,128], index: 4, kind: output, shape index: {}]
  %s5 = sld [smem:[#allocation0]]
  $region53: #{tpu_custom_call.1} parent=0
    _
  %s7 = ssub.s32 1, %s5
  %s8 = scalar_select 0, %s7, %s5
  %9 = sst [smem:[#allocation2]] %s3
  $region1: #{tpu_custom_call.1} parent=0
    #allocation3 [shape = 'u8[262144]{0}', space=vmem, size = 0x40000, scoped, tag = 'input window, operand 0']
    #allocation4 [shape = 's32[2]{0}', space=sflag, size = 0x8, scoped, tag = 'scoped memory for tpu_custom_call.1']
    #allocation5 [shape = 's32[2]{0}', space=sflag, size = 0x8, scoped, tag = 'scoped memory for tpu_custom_call.1']
    #allocation6 [shape = 'u8[8192]{0}', space=vmem, size = 0x2000, scoped, tag = 'output window, operand 0']
    %10 = vsyncpa [#allocation4], 0
    %s11 = scalar_lea.sflag [#allocation4], 1
    %12 = vsyncpa %s11, 0
    %13 = vsyncpa [#allocation5], 0
    %s14 = scalar_lea.sflag [#allocation5], 1
    %15 = vsyncpa %s14, 0
    loop: start=0, step=1, limit=4
    $region2: #{tpu_custom_call.1} parent=1 // loop_pre_header
      _
    $region3: #{tpu_custom_call.1} parent=1 // loop_header
      %s17 = sphi 0, %s21
      %p18 = scmp.ge.s32.totalorder %s17, 4
      %s24 = sphi 0, %s36
      %s25 = sphi 0, %s32
      %s26 = sphi 0, %s24
      %s27 = sphi 0, %s25
      %s28 = sphi 0, %s26
      %s29 = sphi 0, %s27
      %s41 = sphi 0, %s43
      %s44 = sphi 0, %s41
      %s45 = sphi 0, %s44
      %s61 = sphi 0, %s45
      %s65 = sphi 0, %s65
      %s67 = sphi 0, %s65
      %s68 = sphi 0, %s67
      %s82 = sphi 0, %s68
      %s86 = sphi 0, %s86
      %s88 = sphi 0, %s86
      %s89 = sphi 0, %s88
      %s103 = sphi 0, %s89
      %s107 = sphi 0, %s107
      %s109 = sphi 0, %s107
      %s110 = sphi 0, %s109
      %s124 = sphi 0, %s110
      %s132 = sphi 0, %s134
      %s135 = sphi 0, %s132
      %s136 = sphi 0, %s135
      %s152 = sphi 0, %s136
    $region4: #{tpu_custom_call.1} parent=1 // loop_header_branch
      %20 = sbr.rel (%p18) target = $region8
    $region5: #{tpu_custom_call.1} parent=1 // loop_body
      %s22 = ssub.s32 %s17, 1
      %s23 = ssub.s32 %s17, 2
      %s30 = sadd.s32 1, %s25
      %p31 = scmp.ge.s32.totalorder %s30, 1
      %s32 = scalar_select %p31, 0, %s30
      %s33 = sadd.s32 1, %s24
      %s34 = scalar_select %p31, %s33, %s24
      %p35 = scmp.ge.s32.totalorder %s34, 2
      %s36 = scalar_select %p35, 0, %s34
      %s37 = ssub.s32 %s24, %s36
      %s38 = ssub.s32 %s25, %s32
      %s39 = sor.u32 %s37, %s38
      %p40 = scmp.eq.s32.totalorder %s39, 0
      %s42 = sadd.s32 %s41, 1
      %s43 = scalar_select %p40, %s41, %s42
      %p46 = pneg %p40
      %p47 = scmp.eq.s32.totalorder %s17, 1
      %p48 = por %p46, %p47
      %p49 = scmp.ne.s32.totalorder %s41, %s44
      %p50 = scmp.eq.s32.totalorder %s17, 0
      %p51 = por %p49, %p50
      %p52 = scmp.ne.s32.totalorder %s41, %s44
      %p53 = scmp.eq.s32.totalorder %s22, 1
      %p54 = por %p52, %p53
      %p55 = scmp.ne.s32.totalorder %s44, %s45
      %p56 = scmp.eq.s32.totalorder %s22, 0
      %p57 = por %p55, %p56
      %p58 = scmp.ne.s32.totalorder %s44, %s45
      %p59 = scmp.eq.s32.totalorder %s23, 1
      %p60 = por %p58, %p59
      %p62 = scmp.ne.s32.totalorder %s45, %s61
      %p63 = scmp.eq.s32.totalorder %s23, 0
      %p64 = por %p62, %p63
      %s66 = sadd.s32 %s65, 1
      %p69 = scmp.eq.s32.totalorder %s17, 1
      %p70 = scmp.ne.s32.totalorder %s65, %s67
      %p71 = scmp.eq.s32.totalorder %s17, 0
      %p72 = por %p70, %p71
      %p73 = scmp.ne.s32.totalorder %s65, %s67
      %p74 = scmp.eq.s32.totalorder %s22, 1
      %p75 = por %p73, %p74
      %p76 = scmp.ne.s32.totalorder %s67, %s68
      %p77 = scmp.eq.s32.totalorder %s22, 0
      %p78 = por %p76, %p77
      %p79 = scmp.ne.s32.totalorder %s67, %s68
      %p80 = scmp.eq.s32.totalorder %s23, 1
      %p81 = por %p79, %p80
      %p83 = scmp.ne.s32.totalorder %s68, %s82
      %p84 = scmp.eq.s32.totalorder %s23, 0
      %p85 = por %p83, %p84
      %s87 = sadd.s32 %s86, 1
      %p90 = scmp.eq.s32.totalorder %s17, 1
      %p91 = scmp.ne.s32.totalorder %s86, %s88
      %p92 = scmp.eq.s32.totalorder %s17, 0
      %p93 = por %p91, %p92
      %p94 = scmp.ne.s32.totalorder %s86, %s88
      %p95 = scmp.eq.s32.totalorder %s22, 1
      %p96 = por %p94, %p95
      %p97 = scmp.ne.s32.totalorder %s88, %s89
      %p98 = scmp.eq.s32.totalorder %s22, 0
      %p99 = por %p97, %p98
      %p100 = scmp.ne.s32.totalorder %s88, %s89
      %p101 = scmp.eq.s32.totalorder %s23, 1
      %p102 = por %p100, %p101
      %p104 = scmp.ne.s32.totalorder %s89, %s103
      %p105 = scmp.eq.s32.totalorder %s23, 0
      %p106 = por %p104, %p105
      %s108 = sadd.s32 %s107, 1
      %p111 = scmp.eq.s32.totalorder %s17, 1
      %p112 = scmp.ne.s32.totalorder %s107, %s109
      %p113 = scmp.eq.s32.totalorder %s17, 0
      %p114 = por %p112, %p113
      %p115 = scmp.ne.s32.totalorder %s107, %s109
      %p116 = scmp.eq.s32.totalorder %s22, 1
      %p117 = por %p115, %p116
      %p118 = scmp.ne.s32.totalorder %s109, %s110
      %p119 = scmp.eq.s32.totalorder %s22, 0
      %p120 = por %p118, %p119
      %p121 = scmp.ne.s32.totalorder %s109, %s110
      %p122 = scmp.eq.s32.totalorder %s23, 1
      %p123 = por %p121, %p122
      %p125 = scmp.ne.s32.totalorder %s110, %s124
      %p126 = scmp.eq.s32.totalorder %s23, 0
      %p127 = por %p125, %p126
      %s128 = ssub.s32 %s24, %s36
      %s129 = ssub.s32 %s25, %s32
      %s130 = sor.u32 %s128, %s129
      %p131 = scmp.eq.s32.totalorder %s130, 0
      %s133 = sadd.s32 %s132, 1
      %s134 = scalar_select %p131, %s132, %s133
      %p137 = pneg %p131
      %p138 = scmp.eq.s32.totalorder %s17, 1
      %p139 = por %p137, %p138
      %p140 = scmp.ne.s32.totalorder %s132, %s135
      %p141 = scmp.eq.s32.totalorder %s17, 0
      %p142 = por %p140, %p141
      %p143 = scmp.ne.s32.totalorder %s132, %s135
      %p144 = scmp.eq.s32.totalorder %s22, 1
      %p145 = por %p143, %p144
      %p146 = scmp.ne.s32.totalorder %s135, %s136
      %p147 = scmp.eq.s32.totalorder %s22, 0
      %p148 = por %p146, %p147
      %p149 = scmp.ne.s32.totalorder %s135, %s136
      %p150 = scmp.eq.s32.totalorder %s23, 1
      %p151 = por %p149, %p150
      %p153 = scmp.ne.s32.totalorder %s136, %s152
      %p154 = scmp.eq.s32.totalorder %s23, 0
      %p155 = por %p153, %p154
      %p156 = scmp.le.s32.totalorder 1, %s17
      %p157 = scmp.lt.s32.totalorder %s17, 3
      %p158 = pnand %p156, %p157
      %p159 = pneg %p158
      // Predicated region
      $region9: #{tpu_custom_call.1} parent=5 // pred_check
        _
      $region10: #{tpu_custom_call.1} parent=5 // pred_check_branch
        %161 = sbr.rel (%p158) target = $region12
      $region11: #{tpu_custom_call.1} parent=5 // pred_region
        %s162 = ssub.s32 %s17, 1
        // Predicated region
        $region13: #{tpu_custom_call.1} parent=11 // pred_check
          %p163 = pneg %p78
        $region14: #{tpu_custom_call.1} parent=11 // pred_check_branch
          %165 = sbr.rel (%p163) target = $region16
        $region15: #{tpu_custom_call.1} parent=11 // pred_region
          _
        $region16: #{tpu_custom_call.1} parent=11 // pred_fallthru
          _
        // Predicated region
        $region17: #{tpu_custom_call.1} parent=11 // pred_check
          %p166 = pneg %p99
        $region18: #{tpu_custom_call.1} parent=11 // pred_check_branch
          %168 = sbr.rel (%p166) target = $region20
        $region19: #{tpu_custom_call.1} parent=11 // pred_region
          _
        $region20: #{tpu_custom_call.1} parent=11 // pred_fallthru
          _
        // Predicated region
        $region21: #{tpu_custom_call.1} parent=11 // pred_check
          %p169 = pneg %p120
        $region22: #{tpu_custom_call.1} parent=11 // pred_check_branch
          %171 = sbr.rel (%p169) target = $region24
        $region23: #{tpu_custom_call.1} parent=11 // pred_region
          _
        $region24: #{tpu_custom_call.1} parent=11 // pred_fallthru
          _
      $region12: #{tpu_custom_call.1} parent=5 // pred_fallthru
        _
      %p172 = scmp.lt.s32.totalorder %s17, 2
      // Predicated region
      $region25: #{tpu_custom_call.1} parent=5 // pred_check
        %p173 = pneg %p172
      $region26: #{tpu_custom_call.1} parent=5 // pred_check_branch
        %175 = sbr.rel (%p173) target = $region28
      $region27: #{tpu_custom_call.1} parent=5 // pred_region
        // Predicated region
        $region29: #{tpu_custom_call.1} parent=27 // pred_check
          %p176 = pneg %p51
        $region30: #{tpu_custom_call.1} parent=27 // pred_check_branch
          %178 = sbr.rel (%p176) target = $region32
        $region31: #{tpu_custom_call.1} parent=27 // pred_region
          %s179 = sand.u32 %s41, 1
          %s180 = scalar_lea.sflag [#allocation4], %s179
          %s181 = sand.u32 %s41, 1
          %s182 = smul.addr %s181, 256
          %s183 = scalar_lea.vmem [#allocation3], %s182
          %s185 = ssub.s32 4096, 4096
          %186 = vsyncadd %s180, %s185
          %s187 = smul.addr %s24, 32
          %s188 = sadd.s32 %s25, %s187
          %s189 = smul.addr %s188, 128
          %s190 = scalar_lea.hbm %s0, %s189
          %s191 = sshll.u32 %s183, 4
          %s192 = int_to_ptr.vmem [resolvable:$true] %s191
          %197 = dma.hbm_to_vmem [thread:$0]  %s190, 4096, %s192, %s180, 128, 128, 8
        $region32: #{tpu_custom_call.1} parent=27 // pred_fallthru
          _
      $region28: #{tpu_custom_call.1} parent=5 // pred_fallthru
        _
      %p198 = scmp.le.s32.totalorder 1, %s17
      %p199 = scmp.lt.s32.totalorder %s17, 3
      %p200 = pnand %p198, %p199
      %p201 = pneg %p200
      // Predicated region
      $region33: #{tpu_custom_call.1} parent=5 // pred_check
        _
      $region34: #{tpu_custom_call.1} parent=5 // pred_check_branch
        %203 = sbr.rel (%p200) target = $region36
      $region35: #{tpu_custom_call.1} parent=5 // pred_region
        %s204 = ssub.s32 %s17, 1
        %s205 = sand.u32 %s44, 1
        %s206 = scalar_lea.sflag [#allocation4], %s205
        %s207 = sand.u32 %s44, 1
        %s208 = smul.addr %s207, 256
        %s209 = scalar_lea.vmem [#allocation3], %s208
        // Predicated region
        $region37: #{tpu_custom_call.1} parent=35 // pred_check
          %p210 = pneg %p57
        $region38: #{tpu_custom_call.1} parent=35 // pred_check_branch
          %212 = sbr.rel (%p210) target = $region40
        $region39: #{tpu_custom_call.1} parent=35 // pred_region
          %213 = dma.done %s206, 4096
        $region40: #{tpu_custom_call.1} parent=35 // pred_fallthru
          _
        %s214 = sand.u32 %s44, 1
        %s215 = scalar_lea.sflag [#allocation4], %s214
        %s216 = sand.u32 %s44, 1
        %s217 = smul.addr %s216, 256
        %s218 = scalar_lea.vmem [#allocation3], %s217
        %p219 = pneg %p57
        %p220 = pneg %p54
        %p221 = pneg %p78
        %p222 = pneg %p75
        %p223 = pneg %p99
        %p224 = pneg %p96
        %p225 = pneg %p120
        %p226 = pneg %p117
        %p227 = pneg %p148
        %p228 = pneg %p145
        %s229 = sand.u32 %s135, 1
        %s230 = scalar_lea.sflag [#allocation5], %s229
        %s231 = sand.u32 %s135, 1
        %s232 = smul.addr %s231, 8
        %s233 = scalar_lea.vmem [#allocation6], %s232
        %v234 = vld [vmem:[%s209] sm:$0xff]
        %v235 = vld [vmem:[%s209 + $0x8] sm:$0xff]
        %v236 = vld [vmem:[%s209 + $0x10] sm:$0xff]
        %v237 = vld [vmem:[%s209 + $0x18] sm:$0xff]
        %v238 = vld [vmem:[%s209 + $0x20] sm:$0xff]
        %v239 = vld [vmem:[%s209 + $0x28] sm:$0xff]
        %v240 = vld [vmem:[%s209 + $0x30] sm:$0xff]
        %v241 = vld [vmem:[%s209 + $0x38] sm:$0xff]
        %v242 = vld [vmem:[%s209 + $0x40] sm:$0xff]
        %v243 = vld [vmem:[%s209 + $0x48] sm:$0xff]
        %v244 = vld [vmem:[%s209 + $0x50] sm:$0xff]
        %v245 = vld [vmem:[%s209 + $0x58] sm:$0xff]
        %v246 = vld [vmem:[%s209 + $0x60] sm:$0xff]
        %v247 = vld [vmem:[%s209 + $0x68] sm:$0xff]
        %v248 = vld [vmem:[%s209 + $0x70] sm:$0xff]
        %v249 = vld [vmem:[%s209 + $0x78] sm:$0xff]
        %v250 = vld [vmem:[%s209 + $0x80] sm:$0xff]
        %v251 = vld [vmem:[%s209 + $0x88] sm:$0xff]
        %v252 = vld [vmem:[%s209 + $0x90] sm:$0xff]
        %v253 = vld [vmem:[%s209 + $0x98] sm:$0xff]
        %v254 = vld [vmem:[%s209 + $0xa0] sm:$0xff]
        %v255 = vld [vmem:[%s209 + $0xa8] sm:$0xff]
        %v256 = vld [vmem:[%s209 + $0xb0] sm:$0xff]
        %v257 = vld [vmem:[%s209 + $0xb8] sm:$0xff]
        %v258 = vld [vmem:[%s209 + $0xc0] sm:$0xff]
        %v259 = vld [vmem:[%s209 + $0xc8] sm:$0xff]
        %v260 = vld [vmem:[%s209 + $0xd0] sm:$0xff]
        %v261 = vld [vmem:[%s209 + $0xd8] sm:$0xff]
        %v262 = vld [vmem:[%s209 + $0xe0] sm:$0xff]
        %v263 = vld [vmem:[%s209 + $0xe8] sm:$0xff]
        %v264 = vld [vmem:[%s209 + $0xf0] sm:$0xff]
        %v265 = vld [vmem:[%s209 + $0xf8] sm:$0xff]
        %v266 = vld [vmem:[%s1] sm:$0x1]
        %v267 = vld [vmem:[%s1 + $0x1] sm:$0x1]
        %v268 = vld [vmem:[%s1 + $0x2] sm:$0x1]
        %v269 = vld [vmem:[%s1 + $0x3] sm:$0x1]
        %v270 = vld [vmem:[%s1 + $0x4] sm:$0x1]
        %v271 = vld [vmem:[%s1 + $0x5] sm:$0x1]
        %v272 = vld [vmem:[%s1 + $0x6] sm:$0x1]
        %v273 = vld [vmem:[%s1 + $0x7] sm:$0x1]
        %v274 = vld [vmem:[%s1 + $0x8] sm:$0x1]
        %v275 = vld [vmem:[%s1 + $0x9] sm:$0x1]
        %v276 = vld [vmem:[%s1 + $0xa] sm:$0x1]
        %v277 = vld [vmem:[%s1 + $0xb] sm:$0x1]
        %v278 = vld [vmem:[%s1 + $0xc] sm:$0x1]
        %v279 = vld [vmem:[%s1 + $0xd] sm:$0x1]
        %v280 = vld [vmem:[%s1 + $0xe] sm:$0x1]
        %v281 = vld [vmem:[%s1 + $0xf] sm:$0x1]
        %v282 = vld [vmem:[%s1 + $0x10] sm:$0x1]
        %v283 = vld [vmem:[%s1 + $0x11] sm:$0x1]
        %v284 = vld [vmem:[%s1 + $0x12] sm:$0x1]
        %v285 = vld [vmem:[%s1 + $0x13] sm:$0x1]
        %v286 = vld [vmem:[%s1 + $0x14] sm:$0x1]
        %v287 = vld [vmem:[%s1 + $0x15] sm:$0x1]
        %v288 = vld [vmem:[%s1 + $0x16] sm:$0x1]
        %v289 = vld [vmem:[%s1 + $0x17] sm:$0x1]
        %v290 = vld [vmem:[%s1 + $0x18] sm:$0x1]
        %v291 = vld [vmem:[%s1 + $0x19] sm:$0x1]
        %v292 = vld [vmem:[%s1 + $0x1a] sm:$0x1]
        %v293 = vld [vmem:[%s1 + $0x1b] sm:$0x1]
        %v294 = vld [vmem:[%s1 + $0x1c] sm:$0x1]
        %v295 = vld [vmem:[%s1 + $0x1d] sm:$0x1]
        %v296 = vld [vmem:[%s1 + $0x1e] sm:$0x1]
        %v297 = vld [vmem:[%s1 + $0x1f] sm:$0x1]
        %v330 = vlaneseq
        %v331 = vshrl.u32 %v330, 7
        %v332 = vsub.s32 0, %v331
        %v333 = vrot.slane %v266, %v332
        %v334 = vlaneseq
        %v335 = vshrl.u32 %v334, 7
        %v336 = vsub.s32 0, %v335
        %v337 = vrot.slane %v267, %v336
        %v338 = vlaneseq
        %v339 = vshrl.u32 %v338, 7
        %v340 = vsub.s32 0, %v339
        %v341 = vrot.slane %v268, %v340
        %v342 = vlaneseq
        %v343 = vshrl.u32 %v342, 7
        %v344 = vsub.s32 0, %v343
        %v345 = vrot.slane %v269, %v344
        %v346 = vlaneseq
        %v347 = vshrl.u32 %v346, 7
        %v348 = vsub.s32 0, %v347
        %v349 = vrot.slane %v270, %v348
        %v350 = vlaneseq
        %v351 = vshrl.u32 %v350, 7
        %v352 = vsub.s32 0, %v351
        %v353 = vrot.slane %v271, %v352
        %v354 = vlaneseq
        %v355 = vshrl.u32 %v354, 7
        %v356 = vsub.s32 0, %v355
        %v357 = vrot.slane %v272, %v356
        %v358 = vlaneseq
        %v359 = vshrl.u32 %v358, 7
        %v360 = vsub.s32 0, %v359
        %v361 = vrot.slane %v273, %v360
        %v362 = vlaneseq
        %v363 = vshrl.u32 %v362, 7
        %v364 = vsub.s32 0, %v363
        %v365 = vrot.slane %v274, %v364
        %v366 = vlaneseq
        %v367 = vshrl.u32 %v366, 7
        %v368 = vsub.s32 0, %v367
        %v369 = vrot.slane %v275, %v368
        %v370 = vlaneseq
        %v371 = vshrl.u32 %v370, 7
        %v372 = vsub.s32 0, %v371
        %v373 = vrot.slane %v276, %v372
        %v374 = vlaneseq
        %v375 = vshrl.u32 %v374, 7
        %v376 = vsub.s32 0, %v375
        %v377 = vrot.slane %v277, %v376
        %v378 = vlaneseq
        %v379 = vshrl.u32 %v378, 7
        %v380 = vsub.s32 0, %v379
        %v381 = vrot.slane %v278, %v380
        %v382 = vlaneseq
        %v383 = vshrl.u32 %v382, 7
        %v384 = vsub.s32 0, %v383
        %v385 = vrot.slane %v279, %v384
        %v386 = vlaneseq
        %v387 = vshrl.u32 %v386, 7
        %v388 = vsub.s32 0, %v387
        %v389 = vrot.slane %v280, %v388
        %v390 = vlaneseq
        %v391 = vshrl.u32 %v390, 7
        %v392 = vsub.s32 0, %v391
        %v393 = vrot.slane %v281, %v392
        %v394 = vlaneseq
        %v395 = vshrl.u32 %v394, 7
        %v396 = vsub.s32 0, %v395
        %v397 = vrot.slane %v282, %v396
        %v398 = vlaneseq
        %v399 = vshrl.u32 %v398, 7
        %v400 = vsub.s32 0, %v399
        %v401 = vrot.slane %v283, %v400
        %v402 = vlaneseq
        %v403 = vshrl.u32 %v402, 7
        %v404 = vsub.s32 0, %v403
        %v405 = vrot.slane %v284, %v404
        %v406 = vlaneseq
        %v407 = vshrl.u32 %v406, 7
        %v408 = vsub.s32 0, %v407
        %v409 = vrot.slane %v285, %v408
        %v410 = vlaneseq
        %v411 = vshrl.u32 %v410, 7
        %v412 = vsub.s32 0, %v411
        %v413 = vrot.slane %v286, %v412
        %v414 = vlaneseq
        %v415 = vshrl.u32 %v414, 7
        %v416 = vsub.s32 0, %v415
        %v417 = vrot.slane %v287, %v416
        %v418 = vlaneseq
        %v419 = vshrl.u32 %v418, 7
        %v420 = vsub.s32 0, %v419
        %v421 = vrot.slane %v288, %v420
        %v422 = vlaneseq
        %v423 = vshrl.u32 %v422, 7
        %v424 = vsub.s32 0, %v423
        %v425 = vrot.slane %v289, %v424
        %v426 = vlaneseq
        %v427 = vshrl.u32 %v426, 7
        %v428 = vsub.s32 0, %v427
        %v429 = vrot.slane %v290, %v428
        %v430 = vlaneseq
        %v431 = vshrl.u32 %v430, 7
        %v432 = vsub.s32 0, %v431
        %v433 = vrot.slane %v291, %v432
        %v434 = vlaneseq
        %v435 = vshrl.u32 %v434, 7
        %v436 = vsub.s32 0, %v435
        %v437 = vrot.slane %v292, %v436
        %v438 = vlaneseq
        %v439 = vshrl.u32 %v438, 7
        %v440 = vsub.s32 0, %v439
        %v441 = vrot.slane %v293, %v440
        %v442 = vlaneseq
        %v443 = vshrl.u32 %v442, 7
        %v444 = vsub.s32 0, %v443
        %v445 = vrot.slane %v294, %v444
        %v446 = vlaneseq
        %v447 = vshrl.u32 %v446, 7
        %v448 = vsub.s32 0, %v447
        %v449 = vrot.slane %v295, %v448
        %v450 = vlaneseq
        %v451 = vshrl.u32 %v450, 7
        %v452 = vsub.s32 0, %v451
        %v453 = vrot.slane %v296, %v452
        %v454 = vlaneseq
        %v455 = vshrl.u32 %v454, 7
        %v456 = vsub.s32 0, %v455
        %v457 = vrot.slane %v297, %v456
        %458 = vset.pattern.permute.xlu0 0
        %459 = vperm.xlu0 %458, %v333
        %v460 = vpop.permute.xlu0 %459
        %462 = vset.pattern.permute.xlu0 0
        %463 = vperm.xlu0 %462, %v337
        %v464 = vpop.permute.xlu0 %463
        %466 = vset.pattern.permute.xlu0 0
        %467 = vperm.xlu0 %466, %v341
        %v468 = vpop.permute.xlu0 %467
        %470 = vset.pattern.permute.xlu0 0
        %471 = vperm.xlu0 %470, %v345
        %v472 = vpop.permute.xlu0 %471
        %474 = vset.pattern.permute.xlu0 0
        %475 = vperm.xlu0 %474, %v349
        %v476 = vpop.permute.xlu0 %475
        %478 = vset.pattern.permute.xlu0 0
        %479 = vperm.xlu0 %478, %v353
        %v480 = vpop.permute.xlu0 %479
        %482 = vset.pattern.permute.xlu0 0
        %483 = vperm.xlu0 %482, %v357
        %v484 = vpop.permute.xlu0 %483
        %486 = vset.pattern.permute.xlu0 0
        %487 = vperm.xlu0 %486, %v361
        %v488 = vpop.permute.xlu0 %487
        %490 = vset.pattern.permute.xlu0 0
        %491 = vperm.xlu0 %490, %v365
        %v492 = vpop.permute.xlu0 %491
        %494 = vset.pattern.permute.xlu0 0
        %495 = vperm.xlu0 %494, %v369
        %v496 = vpop.permute.xlu0 %495
        %498 = vset.pattern.permute.xlu0 0
        %499 = vperm.xlu0 %498, %v373
        %v500 = vpop.permute.xlu0 %499
        %502 = vset.pattern.permute.xlu0 0
        %503 = vperm.xlu0 %502, %v377
        %v504 = vpop.permute.xlu0 %503
        %506 = vset.pattern.permute.xlu0 0
        %507 = vperm.xlu0 %506, %v381
        %v508 = vpop.permute.xlu0 %507
        %510 = vset.pattern.permute.xlu0 0
        %511 = vperm.xlu0 %510, %v385
        %v512 = vpop.permute.xlu0 %511
        %514 = vset.pattern.permute.xlu0 0
        %515 = vperm.xlu0 %514, %v389
        %v516 = vpop.permute.xlu0 %515
        %518 = vset.pattern.permute.xlu0 0
        %519 = vperm.xlu0 %518, %v393
        %v520 = vpop.permute.xlu0 %519
        %522 = vset.pattern.permute.xlu0 0
        %523 = vperm.xlu0 %522, %v397
        %v524 = vpop.permute.xlu0 %523
        %526 = vset.pattern.permute.xlu0 0
        %527 = vperm.xlu0 %526, %v401
        %v528 = vpop.permute.xlu0 %527
        %530 = vset.pattern.permute.xlu0 0
        %531 = vperm.xlu0 %530, %v405
        %v532 = vpop.permute.xlu0 %531
        %534 = vset.pattern.permute.xlu0 0
        %535 = vperm.xlu0 %534, %v409
        %v536 = vpop.permute.xlu0 %535
        %538 = vset.pattern.permute.xlu0 0
        %539 = vperm.xlu0 %538, %v413
        %v540 = vpop.permute.xlu0 %539
        %542 = vset.pattern.permute.xlu0 0
        %543 = vperm.xlu0 %542, %v417
        %v544 = vpop.permute.xlu0 %543
        %546 = vset.pattern.permute.xlu0 0
        %547 = vperm.xlu0 %546, %v421
        %v548 = vpop.permute.xlu0 %547
        %550 = vset.pattern.permute.xlu0 0
        %551 = vperm.xlu0 %550, %v425
        %v552 = vpop.permute.xlu0 %551
        %554 = vset.pattern.permute.xlu0 0
        %555 = vperm.xlu0 %554, %v429
        %v556 = vpop.permute.xlu0 %555
        %558 = vset.pattern.permute.xlu0 0
        %559 = vperm.xlu0 %558, %v433
        %v560 = vpop.permute.xlu0 %559
        %562 = vset.pattern.permute.xlu0 0
        %563 = vperm.xlu0 %562, %v437
        %v564 = vpop.permute.xlu0 %563
        %566 = vset.pattern.permute.xlu0 0
        %567 = vperm.xlu0 %566, %v441
        %v568 = vpop.permute.xlu0 %567
        %570 = vset.pattern.permute.xlu0 0
        %571 = vperm.xlu0 %570, %v445
        %v572 = vpop.permute.xlu0 %571
        %574 = vset.pattern.permute.xlu0 0
        %575 = vperm.xlu0 %574, %v449
        %v576 = vpop.permute.xlu0 %575
        %578 = vset.pattern.permute.xlu0 0
        %579 = vperm.xlu0 %578, %v453
        %v580 = vpop.permute.xlu0 %579
        %582 = vset.pattern.permute.xlu0 0
        %583 = vperm.xlu0 %582, %v457
        %v584 = vpop.permute.xlu0 %583
        %v586 = vmul.f32 %v234, %v460
        %v587 = vmul.f32 %v235, %v464
        %v588 = vmul.f32 %v236, %v468
        %v589 = vmul.f32 %v237, %v472
        %v590 = vmul.f32 %v238, %v476
        %v591 = vmul.f32 %v239, %v480
        %v592 = vmul.f32 %v240, %v484
        %v593 = vmul.f32 %v241, %v488
        %v594 = vmul.f32 %v242, %v492
        %v595 = vmul.f32 %v243, %v496
        %v596 = vmul.f32 %v244, %v500
        %v597 = vmul.f32 %v245, %v504
        %v598 = vmul.f32 %v246, %v508
        %v599 = vmul.f32 %v247, %v512
        %v600 = vmul.f32 %v248, %v516
        %v601 = vmul.f32 %v249, %v520
        %v602 = vmul.f32 %v250, %v524
        %v603 = vmul.f32 %v251, %v528
        %v604 = vmul.f32 %v252, %v532
        %v605 = vmul.f32 %v253, %v536
        %v606 = vmul.f32 %v254, %v540
        %v607 = vmul.f32 %v255, %v544
        %v608 = vmul.f32 %v256, %v548
        %v609 = vmul.f32 %v257, %v552
        %v610 = vmul.f32 %v258, %v556
        %v611 = vmul.f32 %v259, %v560
        %v612 = vmul.f32 %v260, %v564
        %v613 = vmul.f32 %v261, %v568
        %v614 = vmul.f32 %v262, %v572
        %v615 = vmul.f32 %v263, %v576
        %v616 = vmul.f32 %v264, %v580
        %v617 = vmul.f32 %v265, %v584
        %vm618 = vcmask 326656
        %v619 = vsel %vm618, %v586, 0.0
        %v620 = vsel %vm618, %v587, 0.0
        %v621 = vadd.f32 %v619, %v620
        %v622 = vsel %vm618, %v588, 0.0
        %v623 = vadd.f32 %v621, %v622
        %v624 = vsel %vm618, %v589, 0.0
        %v625 = vadd.f32 %v623, %v624
        %v626 = vsel %vm618, %v590, 0.0
        %v627 = vadd.f32 %v625, %v626
        %v628 = vsel %vm618, %v591, 0.0
        %v629 = vadd.f32 %v627, %v628
        %v630 = vsel %vm618, %v592, 0.0
        %v631 = vadd.f32 %v629, %v630
        %v632 = vsel %vm618, %v593, 0.0
        %v633 = vadd.f32 %v631, %v632
        %v634 = vsel %vm618, %v594, 0.0
        %v635 = vadd.f32 %v633, %v634
        %v636 = vsel %vm618, %v595, 0.0
        %v637 = vadd.f32 %v635, %v636
        %v638 = vsel %vm618, %v596, 0.0
        %v639 = vadd.f32 %v637, %v638
        %v640 = vsel %vm618, %v597, 0.0
        %v641 = vadd.f32 %v639, %v640
        %v642 = vsel %vm618, %v598, 0.0
        %v643 = vadd.f32 %v641, %v642
        %v644 = vsel %vm618, %v599, 0.0
        %v645 = vadd.f32 %v643, %v644
        %v646 = vsel %vm618, %v600, 0.0
        %v647 = vadd.f32 %v645, %v646
        %v648 = vsel %vm618, %v601, 0.0
        %v649 = vadd.f32 %v647, %v648
        %v650 = vsel %vm618, %v602, 0.0
        %v651 = vadd.f32 %v649, %v650
        %v652 = vsel %vm618, %v603, 0.0
        %v653 = vadd.f32 %v651, %v652
        %v654 = vsel %vm618, %v604, 0.0
        %v655 = vadd.f32 %v653, %v654
        %v656 = vsel %vm618, %v605, 0.0
        %v657 = vadd.f32 %v655, %v656
        %v658 = vsel %vm618, %v606, 0.0
        %v659 = vadd.f32 %v657, %v658
        %v660 = vsel %vm618, %v607, 0.0
        %v661 = vadd.f32 %v659, %v660
        %v662 = vsel %vm618, %v608, 0.0
        %v663 = vadd.f32 %v661, %v662
        %v664 = vsel %vm618, %v609, 0.0
        %v665 = vadd.f32 %v663, %v664
        %v666 = vsel %vm618, %v610, 0.0
        %v667 = vadd.f32 %v665, %v666
        %v668 = vsel %vm618, %v611, 0.0
        %v669 = vadd.f32 %v667, %v668
        %v670 = vsel %vm618, %v612, 0.0
        %v671 = vadd.f32 %v669, %v670
        %v672 = vsel %vm618, %v613, 0.0
        %v673 = vadd.f32 %v671, %v672
        %v674 = vsel %vm618, %v614, 0.0
        %v675 = vadd.f32 %v673, %v674
        %v676 = vsel %vm618, %v615, 0.0
        %v677 = vadd.f32 %v675, %v676
        %v678 = vsel %vm618, %v616, 0.0
        %v679 = vadd.f32 %v677, %v678
        %v680 = vsel %vm618, %v617, 0.0
        %v681 = vadd.f32 %v679, %v680
        %v682 = vld [vmem:[%s2] sm:$0xff]
        %v683 = vld [vmem:[%s2 + $0x8] sm:$0xff]
        %v684 = vld [vmem:[%s2 + $0x10] sm:$0xff]
        %v685 = vld [vmem:[%s2 + $0x18] sm:$0xff]
        %v686 = vld [vmem:[%s2 + $0x20] sm:$0xff]
        %s687 = sld [smem:[#allocation2]]
        %v688 = vstv %s687
        %v690 = vsel %vm618, %v681, 0
        %692 = vmatprep.subr.mxu0 0.0
        %693 = vmatpush1.msra.mxu0 %v682
        %694 = vmatprep.subr.mxu0 0.0
        %695 = vmatpush1.msra.mxu0 %v683
        %696 = vmatprep.subr.mxu0 0.0
        %697 = vmatpush1.msra.mxu0 %v684
        %698 = vmatprep.subr.mxu0 0.0
        %699 = vmatpush1.msra.mxu0 %v685
        %700 = vmatprep.subr.mxu0 0.0
        %701 = vmatpush1.msra.mxu0 %v686
        %702 = vmatprep.subr.mxu0 0.0
        %703 = vmatpush1.msra.mxu0 0.0
        %704 = vmatprep.subr.mxu0 0.0
        %705 = vmatpush1.msra.mxu0 0.0
        %706 = vmatprep.subr.mxu0 0.0
        %707 = vmatpush1.msra.mxu0 0.0
        %708 = vmatprep.subr.mxu0 0.0
        %709 = vmatpush1.msra.mxu0 0.0
        %710 = vmatprep.subr.mxu0 0.0
        %711 = vmatpush1.msra.mxu0 0.0
        %712 = vmatprep.subr.mxu0 0.0
        %713 = vmatpush1.msra.mxu0 0.0
        %714 = vmatprep.subr.mxu0 0.0
        %715 = vmatpush1.msra.mxu0 0.0
        %716 = vmatprep.subr.mxu0 0.0
        %717 = vmatpush1.msra.mxu0 0.0
        %718 = vmatprep.subr.mxu0 0.0
        %719 = vmatpush1.msra.mxu0 0.0
        %720 = vmatprep.subr.mxu0 0.0
        %721 = vmatpush1.msra.mxu0 0.0
        %722 = vmatprep.subr.mxu0 0.0
        %723 = vmatpush1.msra.mxu0 0.0
        %724 = vmatprep.subr.mxu0 0.0
        %725 = vmatpush1.msra.mxu0 0.0
        %726 = vmatprep.subr.mxu0 0.0
        %727 = vmatpush1.msra.mxu0 0.0
        %728 = vmatprep.subr.mxu0 0.0
        %729 = vmatpush1.msra.mxu0 0.0
        %730 = vmatprep.subr.mxu0 0.0
        %731 = vmatpush1.msra.mxu0 0.0
        %732 = vmatprep.subr.mxu0 0.0
        %733 = vmatpush1.msra.mxu0 0.0
        %734 = vmatprep.subr.mxu0 0.0
        %735 = vmatpush1.msra.mxu0 0.0
        %736 = vmatprep.subr.mxu0 0.0
        %737 = vmatpush1.msra.mxu0 0.0
        %738 = vmatprep.subr.mxu0 0.0
        %739 = vmatpush1.msra.mxu0 0.0
        %740 = vmatprep.subr.mxu0 0.0
        %741 = vmatpush1.msra.mxu0 0.0
        %742 = vmatprep.subr.mxu0 0.0
        %743 = vmatpush1.msra.mxu0 0.0
        %744 = vmatprep.subr.mxu0 0.0
        %745 = vmatpush1.msra.mxu0 0.0
        %746 = vmatprep.subr.mxu0 0.0
        %747 = vmatpush1.msra.mxu0 0.0
        %748 = vmatprep.subr.mxu0 0.0
        %749 = vmatpush1.msra.mxu0 0.0
        %750 = vmatprep.subr.mxu0 0.0
        %751 = vmatpush1.msra.mxu0 0.0
        %752 = vmatprep.subr.mxu0 0.0
        %753 = vmatpush1.msra.mxu0 0.0
        %754 = vmatprep.subr.mxu0 0.0
        %755 = vmatpush1.msra.mxu0 0.0
        %756 = vmatprep.mubr.f32.mxu0 0.0
        %757 = vmatmul.mubr.f32.gmra.mrb[0].mxu0 %v690
        %v758 = vpop.f32.mrb[0].mxu0
        %v759 = vadd.f32 %v688, %v758
        %v760 = vpop.f32.mrb[0].mxu0
        %761 = vdwg.mxu0
        %762 = vst [vmem:[%s233] sm:$0xff] %v759
        %s763 = sand.u32 %s135, 1
        %s764 = scalar_lea.sflag [#allocation5], %s763
        %s765 = sand.u32 %s135, 1
        %s766 = smul.addr %s765, 8
        %s767 = scalar_lea.vmem [#allocation6], %s766
        // Predicated region
        $region41: #{tpu_custom_call.1} parent=35 // pred_check
          %p768 = pneg %p145
        $region42: #{tpu_custom_call.1} parent=35 // pred_check_branch
          %770 = sbr.rel (%p768) target = $region44
        $region43: #{tpu_custom_call.1} parent=35 // pred_region
          %s772 = ssub.s32 128, 128
          %773 = vsyncadd %s764, %s772
          %s774 = sadd.s32 %s27, %s26
          %s775 = smul.addr %s774, 128
          %s776 = scalar_lea.hbm %s4, %s775
          %s778 = sshll.u32 %s767, 4
          %s779 = int_to_ptr.vmem [resolvable:$true] %s778
          %781 = dma.vmem_to_hbm [thread:$0]  %s779, 128, %s776, %s764
        $region44: #{tpu_custom_call.1} parent=35 // pred_fallthru
          _
      $region36: #{tpu_custom_call.1} parent=5 // pred_fallthru
        _
      %p782 = scmp.le.s32.totalorder 2, %s17
      // Predicated region
      $region45: #{tpu_custom_call.1} parent=5 // pred_check
        %p783 = pneg %p782
      $region46: #{tpu_custom_call.1} parent=5 // pred_check_branch
        %785 = sbr.rel (%p783) target = $region48
      $region47: #{tpu_custom_call.1} parent=5 // pred_region
        %s786 = ssub.s32 %s17, 2
        // Predicated region
        $region49: #{tpu_custom_call.1} parent=47 // pred_check
          %p787 = pneg %p151
        $region50: #{tpu_custom_call.1} parent=47 // pred_check_branch
          %789 = sbr.rel (%p787) target = $region52
        $region51: #{tpu_custom_call.1} parent=47 // pred_region
          %s790 = sand.u32 %s136, 1
          %s791 = scalar_lea.sflag [#allocation5], %s790
          %s792 = sand.u32 %s136, 1
          %s793 = smul.addr %s792, 8
          %s794 = scalar_lea.vmem [#allocation6], %s793
          %795 = dma.done %s791, 128
        $region52: #{tpu_custom_call.1} parent=47 // pred_fallthru
          _
      $region48: #{tpu_custom_call.1} parent=5 // pred_fallthru
        _
    $region6: #{tpu_custom_call.1} parent=1 // loop_footer
      %s21 = sadd.s32 1, %s17
    $region7: #{tpu_custom_call.1} parent=1 // loop_footer_branch
      %16 = sbr.rel target = $region3
    $region8: #{tpu_custom_call.1} parent=1 // loop_exit
      _
    %796 = vsyncpa [#allocation4], 1
    %s797 = scalar_lea.sflag [#allocation4], 1
    %798 = vsyncpa %s797, 1
    %799 = vsyncpa [#allocation5], 1
    %s800 = scalar_lea.sflag [#allocation5], 1
    %801 = vsyncpa %s800, 1

</llo_original>
